<compile_context>
chip_gen: v6e
topology: v6e:2x2x1
jax: 0.10.0
libtpu: 0.0.40
codegen_flags: <defaults>
</compile_context>

<pallas_src>
import jax
import jax.numpy as jnp
from jax.experimental import pallas as pl
from jax.experimental.pallas import tpu as pltpu


def _round_up(x, m):
    return ((x + m - 1) // m) * m


def _round_down(x, m):
    return (x // m) * m


def _inner_product_decoder_kernel(zr_ref, zct_ref, o_ref):
    # zr_ref : (TM, D)   row tile of z
    # zct_ref: (D, TN)   column tile of z^T (lane-dense RHS)
    # o_ref  : (TM, TN)  output tile of adj
    scores = jnp.dot(zr_ref[...], zct_ref[...],
                     preferred_element_type=jnp.float32)
    # sigmoid(x) == 0.5 * tanh(0.5 * x) + 0.5  -- one EUP op, f32-accurate.
    o_ref[...] = (0.5 * jnp.tanh(0.5 * scores) + 0.5).astype(o_ref.dtype)


def inner_product_decoder(z, *, tm=512, tn=2048, out_dtype=None):
    """adj = sigmoid(z @ z.T), computed in (tm, tn) output tiles.

    out_dtype=jnp.bfloat16 halves the output HBM traffic (the roofline of this
    kernel); default matches the PyTorch module (z.dtype).
    """
    N, D = z.shape
    out_dtype = jnp.dtype(out_dtype if out_dtype is not None else z.dtype)
    in_itemsize = jnp.dtype(z.dtype).itemsize
    out_itemsize = out_dtype.itemsize

    # Sublane granularity of the output tile's second-to-last dim
    # (8 for 32-bit output, 16 for 16-bit packed output).
    sub = 8 * max(1, 4 // out_itemsize)

    # Row tile: multiple of `sub`, capped so the row axis has >= 2 blocks
    # whenever possible (megacore / v7x dual-TensorCore utilization).
    if N < 2 * sub:
        tm = N                                     # single full-dim row block
    else:
        tm = int(min(tm, _round_up(pl.cdiv(N, 2), sub)))
        tm = max(sub, _round_down(tm, sub))

    # Column tile: multiple of 128 lanes (unmasked vst), never larger than N.
    if N < 128:
        tn = N                                     # full-dim lane block
    else:
        tn = int(min(tn, _round_down(N, 128)))
        tn = max(128, _round_down(tn, 128))

    # VMEM budget: double-buffered output tile + double-buffered z row tile
    # + double-buffered z^T column tile.  Shrink tn if a user-supplied tile
    # would overflow a conservative budget (v7x has 64 MiB VMEM per core).
    def _vmem_need(tm_, tn_):
        return (2 * tm_ * tn_ * out_itemsize
                + 2 * tm_ * D * in_itemsize
                + 2 * D * tn_ * in_itemsize)

    while _vmem_need(tm, tn) > (40 << 20) and tn > 128:
        tn = max(128, _round_down(tn // 2, 128))

    vmem_limit = int(min(max(_vmem_need(tm, tn) + (8 << 20), 32 << 20),
                         56 << 20))

    grid = (pl.cdiv(N, tm), pl.cdiv(N, tn))

    compiler_params = pltpu.CompilerParams(
        # Both axes are independent (no accumulation); the outer row axis
        # shards cleanly across TensorCores.
        dimension_semantics=("parallel", "parallel"),
        vmem_limit_bytes=vmem_limit,
    )

    # Pre-transposed column operand: tiny (N*D) relayout done once outside
    # the kernel so the MXU RHS is lane-dense (D, tn).
    z_t = z.T

    return pl.pallas_call(
        _inner_product_decoder_kernel,
        out_shape=jax.ShapeDtypeStruct((N, N), out_dtype),
        grid=grid,
        in_specs=[
            # Row tile of z: block index depends only on i -> re-DMA'd only
            # when the row band changes.
            pl.BlockSpec((tm, D), lambda i, j: (i, 0)),
            # Lane-dense column tile of z^T: streamed per column step
            # (D/tm extra read traffic, negligible vs. the output stores).
            pl.BlockSpec((D, tn), lambda i, j: (0, j)),
        ],
        out_specs=pl.BlockSpec((tm, tn), lambda i, j: (i, j)),
        compiler_params=compiler_params,
    )(z, z_t)


def inner_product_decoder_ref(z):
    return jax.nn.sigmoid(z @ z.T)


if __name__ == "__main__":
    key = jax.random.PRNGKey(0)
    N, D = 256, 32  # small graph: 256 nodes, 32-dim latent embeddings
    z = jax.random.normal(key, (N, D), dtype=jnp.float32)

    adj = jax.block_until_ready(inner_product_decoder(z))
    ref = inner_product_decoder_ref(z)
    assert adj.shape == (N, N)
    assert jnp.allclose(adj, ref, atol=1e-4, rtol=1e-4), "mismatch vs reference"

    # Ragged / non-divisible N: exercises masked edge blocks
    # (no padding, no post-kernel slice).
    N2 = 200
    z2 = jax.random.normal(jax.random.PRNGKey(1), (N2, D), dtype=jnp.float32)
    adj2 = jax.block_until_ready(inner_product_decoder(z2))
    ref2 = inner_product_decoder_ref(z2)
    assert adj2.shape == (N2, N2)
    assert jnp.allclose(adj2, ref2, atol=1e-4, rtol=1e-4), "mismatch (ragged N)"

    # N < 128: full-dim lane-tile path.
    N3 = 100
    z3 = jax.random.normal(jax.random.PRNGKey(2), (N3, D), dtype=jnp.float32)
    adj3 = jax.block_until_ready(inner_product_decoder(z3))
    ref3 = inner_product_decoder_ref(z3)
    assert adj3.shape == (N3, N3)
    assert jnp.allclose(adj3, ref3, atol=1e-4, rtol=1e-4), "mismatch (small N)"

    # bf16 output path: halves the dominant HBM store stream (f32 accumulation
    # and f32 sigmoid inside the kernel, cast only at the store).
    adj_bf16 = jax.block_until_ready(
        inner_product_decoder(z, out_dtype=jnp.bfloat16))
    assert adj_bf16.dtype == jnp.bfloat16
    assert jnp.allclose(adj_bf16.astype(jnp.float32), ref, atol=8e-3), \
        "mismatch (bf16 output)"

    print("KERNEL_OK")
</pallas_src>

<mosaic_0001>
module attributes {stable_mosaic.version = 11 : i64} {
  func.func @_inner_product_decoder_kernel(%arg0: i32, %arg1: i32, %arg2: memref<128x32xf32, #tpu.memory_space<vmem>>, %arg3: memref<32x256xf32, #tpu.memory_space<vmem>>, %arg4: memref<128x256xf32, #tpu.memory_space<vmem>>) attributes {dimension_semantics = [#tpu.dimension_semantics<parallel>, #tpu.dimension_semantics<parallel>], iteration_bounds = array<i64: 2, 1>, scalar_prefetch = 0 : i64, scratch_operands = 0 : i64, tpu.core_type = #tpu.core_type<tc>, window_params = [{transform_indices = @transform_0, window_bounds = array<i64: 128, 32>}, {transform_indices = @transform_1, window_bounds = array<i64: 32, 256>}, {transform_indices = @transform_2, window_bounds = array<i64: 128, 256>}]} {
    %c0 = arith.constant 0 : index
    %c0_0 = arith.constant 0 : index
    %0 = vector.load %arg2[%c0, %c0_0] : memref<128x32xf32, #tpu.memory_space<vmem>>, vector<128x32xf32>
    %c0_1 = arith.constant 0 : index
    %c0_2 = arith.constant 0 : index
    %1 = vector.load %arg3[%c0_1, %c0_2] : memref<32x256xf32, #tpu.memory_space<vmem>>, vector<32x256xf32>
    %cst = arith.constant dense<0.000000e+00> : vector<128x256xf32>
    %2 = tpu.matmul %0, %1, %cst {dimension_numbers = #tpu.dot_dimension_numbers<[1], [0], [0], [1], [0, 0, 1, 1], [], []>} : vector<128x32xf32>, vector<32x256xf32>, vector<128x256xf32> -> vector<128x256xf32>
    %cst_3 = arith.constant 5.000000e-01 : f32
    %3 = vector.broadcast %cst_3 : f32 to vector<128x256xf32>
    %4 = arith.mulf %3, %2 : vector<128x256xf32>
    %5 = math.tanh %4 : vector<128x256xf32>
    %cst_4 = arith.constant 5.000000e-01 : f32
    %6 = vector.broadcast %cst_4 : f32 to vector<128x256xf32>
    %7 = arith.mulf %6, %5 : vector<128x256xf32>
    %cst_5 = arith.constant 5.000000e-01 : f32
    %8 = vector.broadcast %cst_5 : f32 to vector<128x256xf32>
    %9 = arith.addf %7, %8 : vector<128x256xf32>
    %c0_6 = arith.constant 0 : index
    %c0_7 = arith.constant 0 : index
    %10 = vector.load %arg4[%c0_6, %c0_7] : memref<128x256xf32, #tpu.memory_space<vmem>>, vector<128x256xf32>
    tpu.vector_store %arg4[%c0_6, %c0_7], %9 {strides = array<i32>} : memref<128x256xf32, #tpu.memory_space<vmem>>, vector<128x256xf32>,
    return
  }
  func.func @transform_0(%arg0: i32, %arg1: i32) -> (i32, i32) {
    %c0_i32 = arith.constant 0 : i32
    %c0_i32_0 = arith.constant 0 : i32
    return %arg0, %c0_i32 : i32, i32
  }
  func.func @transform_1(%arg0: i32, %arg1: i32) -> (i32, i32) {
    %c0_i32 = arith.constant 0 : i32
    %c0_i32_0 = arith.constant 0 : i32
    return %c0_i32, %arg1 : i32, i32
  }
  func.func @transform_2(%arg0: i32, %arg1: i32) -> (i32, i32) {
    %c0_i32 = arith.constant 0 : i32
    return %arg0, %arg1 : i32, i32
  }
}

</mosaic_0001>

<llo_original>
// kernel: tpu_custom_call.1
$region0: #{tpu_custom_call.1}
  #allocation0 [shape = 'u32[]', space=smem, size = 0x4, offset = 0x4, fixed_abs, tag = 'smem constant byte address 0x4 - core index']
  #allocation1 [shape = 'u32[144,128]{1,0:T(1,128)}', space=vmem, size = 0x12000, scoped, tag = 'internal scratch']
  %s0 = inlined_call_operand.vmem [shape: f32[256,32], index: 0, kind: input, shape index: {}]
  %s1 = inlined_call_operand.vmem [shape: f32[32,256], index: 1, kind: input, shape index: {}]
  %s2 = inlined_call_operand.hbm [shape: f32[256,256], index: 2, kind: output, shape index: {}]
  %s3 = sld [smem:[#allocation0]]
  $region41: #{tpu_custom_call.1} parent=0
    _
  %s5 = ssub.s32 1, %s3
  %s6 = scalar_select 0, %s5, %s3
  $region1: #{tpu_custom_call.1} parent=0
    #allocation2 [shape = 'u8[262144]{0}', space=vmem, size = 0x40000, scoped, tag = 'output window, operand 0']
    #allocation3 [shape = 's32[2]{0}', space=sflag, size = 0x8, scoped, tag = 'scoped memory for tpu_custom_call.1']
    %7 = vsyncpa [#allocation3], 0
    %s8 = scalar_lea.sflag [#allocation3], 1
    %9 = vsyncpa %s8, 0
    loop: start=0, step=1, limit=4
    $region2: #{tpu_custom_call.1} parent=1 // loop_pre_header
      _
    $region3: #{tpu_custom_call.1} parent=1 // loop_header
      %s11 = sphi 0, %s15
      %p12 = scmp.ge.s32.totalorder %s11, 4
      %s18 = sphi 0, %s30
      %s19 = sphi 0, %s26
      %s20 = sphi 0, %s18
      %s21 = sphi 0, %s19
      %s22 = sphi 0, %s20
      %s23 = sphi 0, %s21
      %s33 = sphi 0, %s35
      %s36 = sphi 0, %s33
      %s37 = sphi 0, %s36
      %s53 = sphi 0, %s37
      %s59 = sphi 0, %s61
      %s62 = sphi 0, %s59
      %s63 = sphi 0, %s62
      %s79 = sphi 0, %s63
      %s87 = sphi 0, %s89
      %s90 = sphi 0, %s87
      %s91 = sphi 0, %s90
      %s107 = sphi 0, %s91
    $region4: #{tpu_custom_call.1} parent=1 // loop_header_branch
      %14 = sbr.rel (%p12) target = $region8
    $region5: #{tpu_custom_call.1} parent=1 // loop_body
      %s16 = ssub.s32 %s11, 1
      %s17 = ssub.s32 %s11, 2
      %s24 = sadd.s32 1, %s19
      %p25 = scmp.ge.s32.totalorder %s24, 1
      %s26 = scalar_select %p25, 0, %s24
      %s27 = sadd.s32 1, %s18
      %s28 = scalar_select %p25, %s27, %s18
      %p29 = scmp.ge.s32.totalorder %s28, 2
      %s30 = scalar_select %p29, 0, %s28
      %s31 = ssub.s32 %s18, %s30
      %p32 = scmp.eq.s32.totalorder %s31, 0
      %s34 = sadd.s32 %s33, 1
      %s35 = scalar_select %p32, %s33, %s34
      %p38 = pneg %p32
      %p39 = scmp.eq.s32.totalorder %s11, 1
      %p40 = por %p38, %p39
      %p41 = scmp.ne.s32.totalorder %s33, %s36
      %p42 = scmp.eq.s32.totalorder %s11, 0
      %p43 = por %p41, %p42
      %p44 = scmp.ne.s32.totalorder %s33, %s36
      %p45 = scmp.eq.s32.totalorder %s16, 1
      %p46 = por %p44, %p45
      %p47 = scmp.ne.s32.totalorder %s36, %s37
      %p48 = scmp.eq.s32.totalorder %s16, 0
      %p49 = por %p47, %p48
      %p50 = scmp.ne.s32.totalorder %s36, %s37
      %p51 = scmp.eq.s32.totalorder %s17, 1
      %p52 = por %p50, %p51
      %p54 = scmp.ne.s32.totalorder %s37, %s53
      %p55 = scmp.eq.s32.totalorder %s17, 0
      %p56 = por %p54, %p55
      %s57 = ssub.s32 %s19, %s26
      %p58 = scmp.eq.s32.totalorder %s57, 0
      %s60 = sadd.s32 %s59, 1
      %s61 = scalar_select %p58, %s59, %s60
      %p64 = pneg %p58
      %p65 = scmp.eq.s32.totalorder %s11, 1
      %p66 = por %p64, %p65
      %p67 = scmp.ne.s32.totalorder %s59, %s62
      %p68 = scmp.eq.s32.totalorder %s11, 0
      %p69 = por %p67, %p68
      %p70 = scmp.ne.s32.totalorder %s59, %s62
      %p71 = scmp.eq.s32.totalorder %s16, 1
      %p72 = por %p70, %p71
      %p73 = scmp.ne.s32.totalorder %s62, %s63
      %p74 = scmp.eq.s32.totalorder %s16, 0
      %p75 = por %p73, %p74
      %p76 = scmp.ne.s32.totalorder %s62, %s63
      %p77 = scmp.eq.s32.totalorder %s17, 1
      %p78 = por %p76, %p77
      %p80 = scmp.ne.s32.totalorder %s63, %s79
      %p81 = scmp.eq.s32.totalorder %s17, 0
      %p82 = por %p80, %p81
      %s83 = ssub.s32 %s18, %s30
      %s84 = ssub.s32 %s19, %s26
      %s85 = sor.u32 %s83, %s84
      %p86 = scmp.eq.s32.totalorder %s85, 0
      %s88 = sadd.s32 %s87, 1
      %s89 = scalar_select %p86, %s87, %s88
      %p92 = pneg %p86
      %p93 = scmp.eq.s32.totalorder %s11, 1
      %p94 = por %p92, %p93
      %p95 = scmp.ne.s32.totalorder %s87, %s90
      %p96 = scmp.eq.s32.totalorder %s11, 0
      %p97 = por %p95, %p96
      %p98 = scmp.ne.s32.totalorder %s87, %s90
      %p99 = scmp.eq.s32.totalorder %s16, 1
      %p100 = por %p98, %p99
      %p101 = scmp.ne.s32.totalorder %s90, %s91
      %p102 = scmp.eq.s32.totalorder %s16, 0
      %p103 = por %p101, %p102
      %p104 = scmp.ne.s32.totalorder %s90, %s91
      %p105 = scmp.eq.s32.totalorder %s17, 1
      %p106 = por %p104, %p105
      %p108 = scmp.ne.s32.totalorder %s91, %s107
      %p109 = scmp.eq.s32.totalorder %s17, 0
      %p110 = por %p108, %p109
      %p111 = scmp.le.s32.totalorder 1, %s11
      %p112 = scmp.lt.s32.totalorder %s11, 3
      %p113 = pnand %p111, %p112
      %p114 = pneg %p113
      // Predicated region
      $region9: #{tpu_custom_call.1} parent=5 // pred_check
        _
      $region10: #{tpu_custom_call.1} parent=5 // pred_check_branch
        %116 = sbr.rel (%p113) target = $region12
      $region11: #{tpu_custom_call.1} parent=5 // pred_region
        %s117 = ssub.s32 %s11, 1
        // Predicated region
        $region13: #{tpu_custom_call.1} parent=11 // pred_check
          %p118 = pneg %p75
        $region14: #{tpu_custom_call.1} parent=11 // pred_check_branch
          %120 = sbr.rel (%p118) target = $region16
        $region15: #{tpu_custom_call.1} parent=11 // pred_region
          %s121 = smul.u32 2, %s21
          %p122 = scmp.lt.s32.totalorder %s121, 1
          %s123 = scalar_select %p122, %s121, 1
          %s124 = smul.addr %s123, 8
          %s125 = scalar_lea.vmem %s1, %s124
          %s126 = smul.u32 2, %s21
        $region16: #{tpu_custom_call.1} parent=11 // pred_fallthru
          _
      $region12: #{tpu_custom_call.1} parent=5 // pred_fallthru
        _
      %p127 = scmp.lt.s32.totalorder %s11, 2
      // Predicated region
      $region17: #{tpu_custom_call.1} parent=5 // pred_check
        %p128 = pneg %p127
      $region18: #{tpu_custom_call.1} parent=5 // pred_check_branch
        %130 = sbr.rel (%p128) target = $region20
      $region19: #{tpu_custom_call.1} parent=5 // pred_region
        // Predicated region
        $region21: #{tpu_custom_call.1} parent=19 // pred_check
          %p131 = pneg %p43
        $region22: #{tpu_custom_call.1} parent=19 // pred_check_branch
          %133 = sbr.rel (%p131) target = $region24
        $region23: #{tpu_custom_call.1} parent=19 // pred_region
          %s134 = smul.u32 16, %s18
          %p135 = scmp.lt.s32.totalorder %s134, 31
          %s136 = scalar_select %p135, %s134, 31
          %s137 = smul.addr %s136, 8
          %s138 = scalar_lea.vmem %s0, %s137
          %s139 = smul.u32 16, %s18
        $region24: #{tpu_custom_call.1} parent=19 // pred_fallthru
          _
      $region20: #{tpu_custom_call.1} parent=5 // pred_fallthru
        _
      %p140 = scmp.le.s32.totalorder 1, %s11
      %p141 = scmp.lt.s32.totalorder %s11, 3
      %p142 = pnand %p140, %p141
      %p143 = pneg %p142
      // Predicated region
      $region25: #{tpu_custom_call.1} parent=5 // pred_check
        _
      $region26: #{tpu_custom_call.1} parent=5 // pred_check_branch
        %145 = sbr.rel (%p142) target = $region28
      $region27: #{tpu_custom_call.1} parent=5 // pred_region
        %s146 = ssub.s32 %s11, 1
        %s147 = smul.u32 16, %s20
        %p148 = scmp.lt.s32.totalorder %s147, 31
        %s149 = scalar_select %p148, %s147, 31
        %s150 = smul.addr %s149, 8
        %s151 = scalar_lea.vmem %s0, %s150
        %p152 = pneg %p49
        %p153 = pneg %p46
        %s154 = smul.u32 2, %s21
        %p155 = scmp.lt.s32.totalorder %s154, 1
        %s156 = scalar_select %p155, %s154, 1
        %s157 = smul.addr %s156, 8
        %s158 = scalar_lea.vmem %s1, %s157
        %p159 = pneg %p75
        %p160 = pneg %p72
        %p161 = pneg %p103
        %p162 = pneg %p100
        %s163 = sand.u32 %s90, 1
        %s164 = scalar_lea.sflag [#allocation3], %s163
        %s165 = sand.u32 %s90, 1
        %s166 = smul.addr %s165, 256
        %s167 = scalar_lea.vmem [#allocation2], %s166
        %s168 = smul.u32 16, %s20
        %p169 = scmp.lt.s32.totalorder %s168, 31
        %s170 = scalar_select %p169, %s168, 31
        %s171 = smul.addr %s170, 8
        %s172 = scalar_lea.vmem %s0, %s171
        %s173 = smul.u32 16, %s20
        %s174 = smul.u32 2, %s21
        %p175 = scmp.lt.s32.totalorder %s174, 1
        %s176 = scalar_select %p175, %s174, 1
        %s177 = smul.addr %s176, 8
        %s178 = scalar_lea.vmem %s1, %s177
        %s179 = smul.u32 2, %s21
        %s180 = smul.u32 16, %s20
        %s181 = smul.u32 2, %s21
        %v182 = vld [vmem:[%s172] sm:$0xff]
        %v183 = vld [vmem:[%s172 + $0x8] sm:$0xff]
        %v184 = vld [vmem:[%s172 + $0x10] sm:$0xff]
        %v185 = vld [vmem:[%s172 + $0x18] sm:$0xff]
        %v186 = vld [vmem:[%s172 + $0x20] sm:$0xff]
        %v187 = vld [vmem:[%s172 + $0x28] sm:$0xff]
        %v188 = vld [vmem:[%s172 + $0x30] sm:$0xff]
        %v189 = vld [vmem:[%s172 + $0x38] sm:$0xff]
        %v190 = vld [vmem:[%s172 + $0x40] sm:$0xff]
        %v191 = vld [vmem:[%s172 + $0x48] sm:$0xff]
        %v192 = vld [vmem:[%s172 + $0x50] sm:$0xff]
        %v193 = vld [vmem:[%s172 + $0x58] sm:$0xff]
        %v194 = vld [vmem:[%s172 + $0x60] sm:$0xff]
        %v195 = vld [vmem:[%s172 + $0x68] sm:$0xff]
        %v196 = vld [vmem:[%s172 + $0x70] sm:$0xff]
        %v197 = vld [vmem:[%s172 + $0x78] sm:$0xff]
        %v198 = vld [vmem:[%s178] sm:$0xff]
        %v199 = vld [vmem:[%s178 + $0x8] sm:$0xff]
        %v200 = vld [vmem:[%s178 + $0x10] sm:$0xff]
        %v201 = vld [vmem:[%s178 + $0x18] sm:$0xff]
        %v202 = vld [vmem:[%s178 + $0x20] sm:$0xff]
        %v203 = vld [vmem:[%s178 + $0x28] sm:$0xff]
        %v204 = vld [vmem:[%s178 + $0x30] sm:$0xff]
        %v205 = vld [vmem:[%s178 + $0x38] sm:$0xff]
        %vm206 = vcmask 261120
        %v208 = vsel %vm206, %v182, 0
        %v211 = vsel %vm206, %v183, 0
        %v214 = vsel %vm206, %v184, 0
        %v217 = vsel %vm206, %v185, 0
        %v220 = vsel %vm206, %v186, 0
        %v223 = vsel %vm206, %v187, 0
        %v226 = vsel %vm206, %v188, 0
        %v229 = vsel %vm206, %v189, 0
        %v232 = vsel %vm206, %v190, 0
        %v235 = vsel %vm206, %v191, 0
        %v238 = vsel %vm206, %v192, 0
        %v241 = vsel %vm206, %v193, 0
        %v244 = vsel %vm206, %v194, 0
        %v247 = vsel %vm206, %v195, 0
        %v250 = vsel %vm206, %v196, 0
        %v253 = vsel %vm206, %v197, 0
        %255 = vmatprep.subr.mxu0 0.0
        %256 = vmatpush1.msra.mxu0 0.0
        %257 = vmatprep.subr.mxu0 0.0
        %258 = vmatpush1.msra.mxu0 0.0
        %259 = vmatprep.subr.mxu0 0.0
        %260 = vmatpush1.msra.mxu0 0.0
        %261 = vmatprep.subr.mxu0 0.0
        %262 = vmatpush1.msra.mxu0 0.0
        %263 = vmatprep.subr.mxu0 0.0
        %264 = vmatpush1.msra.mxu0 0.0
        %265 = vmatprep.subr.mxu0 0.0
        %266 = vmatpush1.msra.mxu0 0.0
        %267 = vmatprep.subr.mxu0 0.0
        %268 = vmatpush1.msra.mxu0 0.0
        %269 = vmatprep.subr.mxu0 0.0
        %270 = vmatpush1.msra.mxu0 0.0
        %271 = vmatprep.subr.mxu0 0.0
        %272 = vmatpush1.msra.mxu0 0.0
        %273 = vmatprep.subr.mxu0 0.0
        %274 = vmatpush1.msra.mxu0 0.0
        %275 = vmatprep.subr.mxu0 0.0
        %276 = vmatpush1.msra.mxu0 0.0
        %277 = vmatprep.subr.mxu0 0.0
        %278 = vmatpush1.msra.mxu0 0.0
        %279 = vmatprep.subr.mxu0 %v205
        %280 = vmatpush1.msra.mxu0 %v204
        %281 = vmatprep.subr.mxu0 %v203
        %282 = vmatpush1.msra.mxu0 %v202
        %283 = vmatprep.subr.mxu0 %v201
        %284 = vmatpush1.msra.mxu0 %v200
        %285 = vmatprep.subr.mxu0 %v199
        %286 = vmatpush1.msra.mxu0 %v198
        %287 = vmatprep.subr.mxu0 0.0
        %288 = vmatpush2.msra.mxu0 0.0
        %289 = vmatprep.subr.mxu0 0.0
        %290 = vmatpush2.msra.mxu0 0.0
        %291 = vmatprep.subr.mxu0 0.0
        %292 = vmatpush2.msra.mxu0 0.0
        %293 = vmatprep.subr.mxu0 0.0
        %294 = vmatpush2.msra.mxu0 0.0
        %295 = vmatprep.subr.mxu0 0.0
        %296 = vmatpush2.msra.mxu0 0.0
        %297 = vmatprep.subr.mxu0 0.0
        %298 = vmatpush2.msra.mxu0 0.0
        %299 = vmatprep.subr.mxu0 0.0
        %300 = vmatpush2.msra.mxu0 0.0
        %301 = vmatprep.subr.mxu0 0.0
        %302 = vmatpush2.msra.mxu0 0.0
        %303 = vmatprep.subr.mxu0 0.0
        %304 = vmatpush2.msra.mxu0 0.0
        %305 = vmatprep.subr.mxu0 0.0
        %306 = vmatpush2.msra.mxu0 0.0
        %307 = vmatprep.subr.mxu0 0.0
        %308 = vmatpush2.msra.mxu0 0.0
        %309 = vmatprep.subr.mxu0 0.0
        %310 = vmatpush2.msra.mxu0 0.0
        %311 = vmatprep.subr.mxu0 0.0
        %312 = vmatpush2.msra.mxu0 0.0
        %313 = vmatprep.subr.mxu0 0.0
        %314 = vmatpush2.msra.mxu0 0.0
        %315 = vmatprep.subr.mxu0 0.0
        %316 = vmatpush2.msra.mxu0 0.0
        %317 = vmatprep.subr.mxu0 0.0
        %318 = vmatpush2.msra.mxu0 0.0
        %319 = vmatprep.mubr.f32.mxu0 0.0
        %320 = vmatmul.mubr.f32.gmra.mxu0 %v208
        %v321 = vpop.f32.mrf.mxu0
        %v322 = vadd.f32 0.0, %v321
        %v323 = vpop.f32.mrf.mxu0
        %v324 = vadd.f32 0.0, %v323
        %325 = vmatprep.mubr.f32.mxu0 0.0
        %326 = vmatmul.mubr.f32.gmra.mxu0 %v211
        %v327 = vpop.f32.mrf.mxu0
        %v328 = vadd.f32 0.0, %v327
        %v329 = vpop.f32.mrf.mxu0
        %v330 = vadd.f32 0.0, %v329
        %331 = vmatprep.mubr.f32.mxu0 0.0
        %332 = vmatmul.mubr.f32.gmra.mxu0 %v214
        %v333 = vpop.f32.mrf.mxu0
        %v334 = vadd.f32 0.0, %v333
        %v335 = vpop.f32.mrf.mxu0
        %v336 = vadd.f32 0.0, %v335
        %337 = vmatprep.mubr.f32.mxu0 0.0
        %338 = vmatmul.mubr.f32.gmra.mxu0 %v217
        %v339 = vpop.f32.mrf.mxu0
        %v340 = vadd.f32 0.0, %v339
        %v341 = vpop.f32.mrf.mxu0
        %v342 = vadd.f32 0.0, %v341
        %343 = vmatprep.mubr.f32.mxu0 0.0
        %344 = vmatmul.mubr.f32.gmra.mxu0 %v220
        %v345 = vpop.f32.mrf.mxu0
        %v346 = vadd.f32 0.0, %v345
        %v347 = vpop.f32.mrf.mxu0
        %v348 = vadd.f32 0.0, %v347
        %349 = vmatprep.mubr.f32.mxu0 0.0
        %350 = vmatmul.mubr.f32.gmra.mxu0 %v223
        %v351 = vpop.f32.mrf.mxu0
        %v352 = vadd.f32 0.0, %v351
        %v353 = vpop.f32.mrf.mxu0
        %v354 = vadd.f32 0.0, %v353
        %355 = vmatprep.mubr.f32.mxu0 0.0
        %356 = vmatmul.mubr.f32.gmra.mxu0 %v226
        %v357 = vpop.f32.mrf.mxu0
        %v358 = vadd.f32 0.0, %v357
        %v359 = vpop.f32.mrf.mxu0
        %v360 = vadd.f32 0.0, %v359
        %361 = vmatprep.mubr.f32.mxu0 0.0
        %362 = vmatmul.mubr.f32.gmra.mxu0 %v229
        %v363 = vpop.f32.mrf.mxu0
        %v364 = vadd.f32 0.0, %v363
        %v365 = vpop.f32.mrf.mxu0
        %v366 = vadd.f32 0.0, %v365
        %367 = vmatprep.mubr.f32.mxu0 0.0
        %368 = vmatmul.mubr.f32.gmra.mxu0 %v232
        %v369 = vpop.f32.mrf.mxu0
        %v370 = vadd.f32 0.0, %v369
        %v371 = vpop.f32.mrf.mxu0
        %v372 = vadd.f32 0.0, %v371
        %373 = vmatprep.mubr.f32.mxu0 0.0
        %374 = vmatmul.mubr.f32.gmra.mxu0 %v235
        %v375 = vpop.f32.mrf.mxu0
        %v376 = vadd.f32 0.0, %v375
        %v377 = vpop.f32.mrf.mxu0
        %v378 = vadd.f32 0.0, %v377
        %379 = vmatprep.mubr.f32.mxu0 0.0
        %380 = vmatmul.mubr.f32.gmra.mxu0 %v238
        %v381 = vpop.f32.mrf.mxu0
        %v382 = vadd.f32 0.0, %v381
        %v383 = vpop.f32.mrf.mxu0
        %v384 = vadd.f32 0.0, %v383
        %385 = vmatprep.mubr.f32.mxu0 0.0
        %386 = vmatmul.mubr.f32.gmra.mxu0 %v241
        %v387 = vpop.f32.mrf.mxu0
        %v388 = vadd.f32 0.0, %v387
        %v389 = vpop.f32.mrf.mxu0
        %v390 = vadd.f32 0.0, %v389
        %391 = vmatprep.mubr.f32.mxu0 0.0
        %392 = vmatmul.mubr.f32.gmra.mxu0 %v244
        %v393 = vpop.f32.mrf.mxu0
        %v394 = vadd.f32 0.0, %v393
        %v395 = vpop.f32.mrf.mxu0
        %v396 = vadd.f32 0.0, %v395
        %397 = vmatprep.mubr.f32.mxu0 0.0
        %398 = vmatmul.mubr.f32.gmra.mxu0 %v247
        %v399 = vpop.f32.mrf.mxu0
        %v400 = vadd.f32 0.0, %v399
        %v401 = vpop.f32.mrf.mxu0
        %v402 = vadd.f32 0.0, %v401
        %403 = vmatprep.mubr.f32.mxu0 0.0
        %404 = vmatmul.mubr.f32.gmra.mxu0 %v250
        %v405 = vpop.f32.mrf.mxu0
        %v406 = vadd.f32 0.0, %v405
        %v407 = vpop.f32.mrf.mxu0
        %v408 = vadd.f32 0.0, %v407
        %409 = vmatprep.mubr.f32.mxu0 0.0
        %410 = vmatmul.mubr.f32.gmra.mxu0 %v253
        %v411 = vpop.f32.mrf.mxu0
        %v412 = vadd.f32 0.0, %v411
        %v413 = vpop.f32.mrf.mxu0
        %v414 = vadd.f32 0.0, %v413
        %415 = vdwg.mxu0
        %v416 = vmul.f32 %v322, 0.5
        %v417 = vmul.f32 %v324, 0.5
        %v418 = vmul.f32 %v328, 0.5
        %v419 = vmul.f32 %v330, 0.5
        %v420 = vmul.f32 %v334, 0.5
        %v421 = vmul.f32 %v336, 0.5
        %v422 = vmul.f32 %v340, 0.5
        %v423 = vmul.f32 %v342, 0.5
        %v424 = vmul.f32 %v346, 0.5
        %v425 = vmul.f32 %v348, 0.5
        %v426 = vmul.f32 %v352, 0.5
        %v427 = vmul.f32 %v354, 0.5
        %v428 = vmul.f32 %v358, 0.5
        %v429 = vmul.f32 %v360, 0.5
        %v430 = vmul.f32 %v364, 0.5
        %v431 = vmul.f32 %v366, 0.5
        %v432 = vmul.f32 %v370, 0.5
        %v433 = vmul.f32 %v372, 0.5
        %v434 = vmul.f32 %v376, 0.5
        %v435 = vmul.f32 %v378, 0.5
        %v436 = vmul.f32 %v382, 0.5
        %v437 = vmul.f32 %v384, 0.5
        %v438 = vmul.f32 %v388, 0.5
        %v439 = vmul.f32 %v390, 0.5
        %v440 = vmul.f32 %v394, 0.5
        %v441 = vmul.f32 %v396, 0.5
        %v442 = vmul.f32 %v400, 0.5
        %v443 = vmul.f32 %v402, 0.5
        %v444 = vmul.f32 %v406, 0.5
        %v445 = vmul.f32 %v408, 0.5
        %v446 = vmul.f32 %v412, 0.5
        %v447 = vmul.f32 %v414, 0.5
        %v448 = vtanh.pop %v416
        %v449 = vtanh.pop %v417
        %v450 = vtanh.pop %v418
        %v451 = vtanh.pop %v419
        %v452 = vtanh.pop %v420
        %v453 = vtanh.pop %v421
        %v454 = vtanh.pop %v422
        %v455 = vtanh.pop %v423
        %v456 = vtanh.pop %v424
        %v457 = vtanh.pop %v425
        %v458 = vtanh.pop %v426
        %v459 = vtanh.pop %v427
        %v460 = vtanh.pop %v428
        %v461 = vtanh.pop %v429
        %v462 = vtanh.pop %v430
        %v463 = vtanh.pop %v431
        %v464 = vtanh.pop %v432
        %v465 = vtanh.pop %v433
        %v466 = vtanh.pop %v434
        %v467 = vtanh.pop %v435
        %v468 = vtanh.pop %v436
        %v469 = vtanh.pop %v437
        %v470 = vtanh.pop %v438
        %v471 = vtanh.pop %v439
        %v472 = vtanh.pop %v440
        %v473 = vtanh.pop %v441
        %v474 = vtanh.pop %v442
        %v475 = vtanh.pop %v443
        %v476 = vtanh.pop %v444
        %v477 = vtanh.pop %v445
        %v478 = vtanh.pop %v446
        %v479 = vtanh.pop %v447
        %v480 = vmul.f32 %v448, 0.5
        %v481 = vmul.f32 %v449, 0.5
        %v482 = vmul.f32 %v450, 0.5
        %v483 = vmul.f32 %v451, 0.5
        %v484 = vmul.f32 %v452, 0.5
        %v485 = vmul.f32 %v453, 0.5
        %v486 = vmul.f32 %v454, 0.5
        %v487 = vmul.f32 %v455, 0.5
        %v488 = vmul.f32 %v456, 0.5
        %v489 = vmul.f32 %v457, 0.5
        %v490 = vmul.f32 %v458, 0.5
        %v491 = vmul.f32 %v459, 0.5
        %v492 = vmul.f32 %v460, 0.5
        %v493 = vmul.f32 %v461, 0.5
        %v494 = vmul.f32 %v462, 0.5
        %v495 = vmul.f32 %v463, 0.5
        %v496 = vmul.f32 %v464, 0.5
        %v497 = vmul.f32 %v465, 0.5
        %v498 = vmul.f32 %v466, 0.5
        %v499 = vmul.f32 %v467, 0.5
        %v500 = vmul.f32 %v468, 0.5
        %v501 = vmul.f32 %v469, 0.5
        %v502 = vmul.f32 %v470, 0.5
        %v503 = vmul.f32 %v471, 0.5
        %v504 = vmul.f32 %v472, 0.5
        %v505 = vmul.f32 %v473, 0.5
        %v506 = vmul.f32 %v474, 0.5
        %v507 = vmul.f32 %v475, 0.5
        %v508 = vmul.f32 %v476, 0.5
        %v509 = vmul.f32 %v477, 0.5
        %v510 = vmul.f32 %v478, 0.5
        %v511 = vmul.f32 %v479, 0.5
        %v512 = vadd.f32 %v480, 0.5
        %v513 = vadd.f32 %v481, 0.5
        %v514 = vadd.f32 %v482, 0.5
        %v515 = vadd.f32 %v483, 0.5
        %v516 = vadd.f32 %v484, 0.5
        %v517 = vadd.f32 %v485, 0.5
        %v518 = vadd.f32 %v486, 0.5
        %v519 = vadd.f32 %v487, 0.5
        %v520 = vadd.f32 %v488, 0.5
        %v521 = vadd.f32 %v489, 0.5
        %v522 = vadd.f32 %v490, 0.5
        %v523 = vadd.f32 %v491, 0.5
        %v524 = vadd.f32 %v492, 0.5
        %v525 = vadd.f32 %v493, 0.5
        %v526 = vadd.f32 %v494, 0.5
        %v527 = vadd.f32 %v495, 0.5
        %v528 = vadd.f32 %v496, 0.5
        %v529 = vadd.f32 %v497, 0.5
        %v530 = vadd.f32 %v498, 0.5
        %v531 = vadd.f32 %v499, 0.5
        %v532 = vadd.f32 %v500, 0.5
        %v533 = vadd.f32 %v501, 0.5
        %v534 = vadd.f32 %v502, 0.5
        %v535 = vadd.f32 %v503, 0.5
        %v536 = vadd.f32 %v504, 0.5
        %v537 = vadd.f32 %v505, 0.5
        %v538 = vadd.f32 %v506, 0.5
        %v539 = vadd.f32 %v507, 0.5
        %v540 = vadd.f32 %v508, 0.5
        %v541 = vadd.f32 %v509, 0.5
        %v542 = vadd.f32 %v510, 0.5
        %v543 = vadd.f32 %v511, 0.5
        %544 = vst [vmem:[%s167] sm:$0xff] %v512
        %545 = vst [vmem:[%s167 + $0x8] sm:$0xff] %v513
        %546 = vst [vmem:[%s167 + $0x10] sm:$0xff] %v514
        %547 = vst [vmem:[%s167 + $0x18] sm:$0xff] %v515
        %548 = vst [vmem:[%s167 + $0x20] sm:$0xff] %v516
        %549 = vst [vmem:[%s167 + $0x28] sm:$0xff] %v517
        %550 = vst [vmem:[%s167 + $0x30] sm:$0xff] %v518
        %551 = vst [vmem:[%s167 + $0x38] sm:$0xff] %v519
        %552 = vst [vmem:[%s167 + $0x40] sm:$0xff] %v520
        %553 = vst [vmem:[%s167 + $0x48] sm:$0xff] %v521
        %554 = vst [vmem:[%s167 + $0x50] sm:$0xff] %v522
        %555 = vst [vmem:[%s167 + $0x58] sm:$0xff] %v523
        %556 = vst [vmem:[%s167 + $0x60] sm:$0xff] %v524
        %557 = vst [vmem:[%s167 + $0x68] sm:$0xff] %v525
        %558 = vst [vmem:[%s167 + $0x70] sm:$0xff] %v526
        %559 = vst [vmem:[%s167 + $0x78] sm:$0xff] %v527
        %560 = vst [vmem:[%s167 + $0x80] sm:$0xff] %v528
        %561 = vst [vmem:[%s167 + $0x88] sm:$0xff] %v529
        %562 = vst [vmem:[%s167 + $0x90] sm:$0xff] %v530
        %563 = vst [vmem:[%s167 + $0x98] sm:$0xff] %v531
        %564 = vst [vmem:[%s167 + $0xa0] sm:$0xff] %v532
        %565 = vst [vmem:[%s167 + $0xa8] sm:$0xff] %v533
        %566 = vst [vmem:[%s167 + $0xb0] sm:$0xff] %v534
        %567 = vst [vmem:[%s167 + $0xb8] sm:$0xff] %v535
        %568 = vst [vmem:[%s167 + $0xc0] sm:$0xff] %v536
        %569 = vst [vmem:[%s167 + $0xc8] sm:$0xff] %v537
        %570 = vst [vmem:[%s167 + $0xd0] sm:$0xff] %v538
        %571 = vst [vmem:[%s167 + $0xd8] sm:$0xff] %v539
        %572 = vst [vmem:[%s167 + $0xe0] sm:$0xff] %v540
        %573 = vst [vmem:[%s167 + $0xe8] sm:$0xff] %v541
        %574 = vst [vmem:[%s167 + $0xf0] sm:$0xff] %v542
        %575 = vst [vmem:[%s167 + $0xf8] sm:$0xff] %v543
        %s576 = sand.u32 %s90, 1
        %s577 = scalar_lea.sflag [#allocation3], %s576
        %s578 = sand.u32 %s90, 1
        %s579 = smul.addr %s578, 256
        %s580 = scalar_lea.vmem [#allocation2], %s579
        // Predicated region
        $region29: #{tpu_custom_call.1} parent=27 // pred_check
          %p581 = pneg %p100
        $region30: #{tpu_custom_call.1} parent=27 // pred_check_branch
          %583 = sbr.rel (%p581) target = $region32
        $region31: #{tpu_custom_call.1} parent=27 // pred_region
          %s584 = smul.u32 16, %s20
          %s585 = smul.u32 2, %s21
          %s587 = ssub.s32 4096, 4096
          %588 = vsyncadd %s577, %s587
          %s589 = smul.addr %s584, 2
          %s590 = sadd.s32 %s585, %s589
          %s591 = smul.addr %s590, 128
          %s592 = scalar_lea.hbm %s2, %s591
          %s593 = sshll.u32 %s580, 4
          %s594 = int_to_ptr.vmem [resolvable:$true] %s593
          %599 = dma.vmem_to_hbm [thread:$0]  %s594, 4096, %s592, %s577, 256, 256, 16
        $region32: #{tpu_custom_call.1} parent=27 // pred_fallthru
          _
      $region28: #{tpu_custom_call.1} parent=5 // pred_fallthru
        _
      %p600 = scmp.le.s32.totalorder 2, %s11
      // Predicated region
      $region33: #{tpu_custom_call.1} parent=5 // pred_check
        %p601 = pneg %p600
      $region34: #{tpu_custom_call.1} parent=5 // pred_check_branch
        %603 = sbr.rel (%p601) target = $region36
      $region35: #{tpu_custom_call.1} parent=5 // pred_region
        %s604 = ssub.s32 %s11, 2
        // Predicated region
        $region37: #{tpu_custom_call.1} parent=35 // pred_check
          %p605 = pneg %p106
        $region38: #{tpu_custom_call.1} parent=35 // pred_check_branch
          %607 = sbr.rel (%p605) target = $region40
        $region39: #{tpu_custom_call.1} parent=35 // pred_region
          %s608 = sand.u32 %s91, 1
          %s609 = scalar_lea.sflag [#allocation3], %s608
          %s610 = sand.u32 %s91, 1
          %s611 = smul.addr %s610, 256
          %s612 = scalar_lea.vmem [#allocation2], %s611
          %613 = dma.done %s609, 4096
        $region40: #{tpu_custom_call.1} parent=35 // pred_fallthru
          _
      $region36: #{tpu_custom_call.1} parent=5 // pred_fallthru
        _
    $region6: #{tpu_custom_call.1} parent=1 // loop_footer
      %s15 = sadd.s32 1, %s11
    $region7: #{tpu_custom_call.1} parent=1 // loop_footer_branch
      %10 = sbr.rel target = $region3
    $region8: #{tpu_custom_call.1} parent=1 // loop_exit
      _
    %614 = vsyncpa [#allocation3], 1
    %s615 = scalar_lea.sflag [#allocation3], 1
    %616 = vsyncpa %s615, 1

</llo_original>
